<compile_context>
chip_gen: v6e
topology: v6e:2x2x1
jax: 0.10.0
libtpu: 0.0.40
codegen_flags: <defaults>
</compile_context>

<pallas_src>
import jax
import jax.numpy as jnp
import numpy as np
from jax.experimental import pallas as pl
from jax.experimental.pallas import tpu as pltpu

KS = 3  # conv1 kernel size (hard-coded to 3 in the module)


# ---------------------------------------------------------------------------
# Host-side (static-shape) helpers: bilinear align_corners=True operators.
# ---------------------------------------------------------------------------
def _interp_coords(out_size, in_size):
    """PyTorch F.interpolate(mode='bilinear', align_corners=True) coords."""
    scale = (in_size - 1) / (out_size - 1) if out_size > 1 else 0.0
    src = np.arange(out_size, dtype=np.float64) * scale
    i0 = np.clip(np.floor(src).astype(np.int64), 0, in_size - 1)
    i1 = np.minimum(i0 + 1, in_size - 1)
    frac = src - i0
    return i0, i1, frac


def _interp_matrix(out_size, in_size):
    """Dense (out_size, in_size) bilinear align_corners interpolation matrix."""
    i0, i1, frac = _interp_coords(out_size, in_size)
    m = np.zeros((out_size, in_size), np.float64)
    rows = np.arange(out_size)
    np.add.at(m, (rows, i0), 1.0 - frac)
    np.add.at(m, (rows, i1), frac)
    return m


def _shift_rows(mat, delta):
    """Row p of the result is row p+delta of `mat`, zero rows outside.

    Folds a conv tap offset (and the zero padding it implies) into the
    downsample matrix, so the kernel never pads or takes shifted slices.
    """
    out = np.zeros_like(mat)
    n = mat.shape[0]
    for p in range(n):
        r = p + delta
        if 0 <= r < n:
            out[p] = mat[r]
    return out


# ---------------------------------------------------------------------------
# Pallas kernel: one batch element per grid step, all work on the MXU.
# ---------------------------------------------------------------------------
def _downup_conv_bn_relu_kernel(x_ref, dh_ref, mw_ref, uh_ref, kuw_ref,
                                bias_ref, o_ref):
    # x_ref:    (1, H, W*Ci)      activation, lane-dense on W*Ci
    # dh_ref:   (3, H2, H)        H-downsample, one (shifted) matrix per row tap
    # mw_ref:   (3, W*Ci, W2*Co)  fused {W-downsample + conv + BN-scale} per tap
    # uh_ref:   (H, H2)           H-upsample
    # kuw_ref:  (W2*Co, W*Co)     W-upsample (channel interleaved)
    # bias_ref: (1, W*Co)         folded BN bias tiled to the output lane layout
    # o_ref:    (1, H, W*Co)
    x2 = x_ref[0]                                  # (H, W*Ci)
    h2 = dh_ref.shape[1]
    n_cols = mw_ref.shape[2]

    # conv(BN_scale * .) of the bilinearly-downsampled image as 2*KS wide-K
    # matmuls (K = H and K = W*Ci): no padding pass, no shifted slices.
    acc = jnp.zeros((h2, n_cols), jnp.float32)
    for dy in range(KS):
        a = jnp.dot(dh_ref[dy], x2, preferred_element_type=jnp.float32)
        acc = acc + jnp.dot(a.astype(x2.dtype), mw_ref[dy],
                            preferred_element_type=jnp.float32)

    # bilinear upsample back to (H, W), then bias + ReLU epilogue only.
    up_h = jnp.dot(uh_ref[...], acc.astype(x2.dtype),
                   preferred_element_type=jnp.float32)      # (H, W2*Co)
    out = jnp.dot(up_h.astype(x2.dtype), kuw_ref[...],
                  preferred_element_type=jnp.float32)       # (H, W*Co)
    out = jnp.maximum(out + bias_ref[...], 0.0)
    o_ref[...] = out.reshape(o_ref.shape).astype(o_ref.dtype)


# ---------------------------------------------------------------------------
# Wrapper: PyTorch-style NCHW in / NCHW out.
# ---------------------------------------------------------------------------
def basic_residual_downup_1x(x_nchw, w_oihw, gamma, beta, running_mean,
                             running_var, eps=1e-5):
    N, C_in, H, W = x_nchw.shape
    C_out = w_oihw.shape[0]
    H2, W2 = H // 2, W // 2
    dtype = x_nchw.dtype

    # ---- fold BatchNorm (inference) into the conv weights + a bias ---------
    scale = (gamma / jnp.sqrt(running_var + eps)).astype(jnp.float32)  # (Co,)
    bias = (beta - running_mean * scale).astype(jnp.float32)           # (Co,)
    w_hwio = jnp.transpose(w_oihw, (2, 3, 1, 0)).astype(jnp.float32)   # (3,3,Ci,Co)
    w_scaled = w_hwio * scale[None, None, None, :]                     # scale folded

    # ---- static bilinear operators (align_corners=True) --------------------
    dh_np = _interp_matrix(H2, H)      # downsample along H
    dw_np = _interp_matrix(W2, W)      # downsample along W
    uh_np = _interp_matrix(H, H2)      # upsample along H
    uw_np = _interp_matrix(W, W2)      # upsample along W

    # conv tap offsets (padding = dilation = 1) folded into the downsamplers
    dh_shift = np.stack([_shift_rows(dh_np, dy - 1) for dy in range(KS)])
    dw_shift = np.stack([_shift_rows(dw_np, dx - 1) for dx in range(KS)])

    # fused W-downsample + conv + BN-scale operand (one wide-K slab per dy):
    # mw[dy, w*Ci+ci, q*Co+co] = sum_dx dw_shift[dx, q, w] * w_scaled[dy, dx, ci, co]
    mw = jnp.einsum("xqw,yxio->ywiqo",
                    jnp.asarray(dw_shift, jnp.float32), w_scaled)
    mw = mw.reshape(KS, W * C_in, W2 * C_out).astype(dtype)

    # W-upsample operator in the channel-interleaved output layout:
    # kuw[q*Co + c, w*Co + c] = uw[w, q]
    kuw_np = np.einsum("wq,ij->qiwj", uw_np,
                       np.eye(C_out)).reshape(W2 * C_out, W * C_out)

    dh = jnp.asarray(dh_shift, dtype)                     # (3, H2, H)
    uh = jnp.asarray(uh_np, dtype)                        # (H, H2)
    kuw = jnp.asarray(kuw_np, dtype)                      # (W2*Co, W*Co)
    bias_row = jnp.tile(bias, W).reshape(1, W * C_out)    # f32 epilogue bias

    # ---- lane-dense activation layout: (N, H, W*Ci), merged in HBM ---------
    x2 = jnp.transpose(x_nchw, (0, 2, 3, 1)).reshape(N, H, W * C_in)

    out2 = pl.pallas_call(
        _downup_conv_bn_relu_kernel,
        out_shape=jax.ShapeDtypeStruct((N, H, W * C_out), dtype),
        grid_spec=pltpu.PrefetchScalarGridSpec(
            num_scalar_prefetch=0,
            grid=(N,),
            in_specs=[
                pl.BlockSpec((1, H, W * C_in), lambda n: (n, 0, 0)),
                pl.BlockSpec((KS, H2, H), lambda n: (0, 0, 0)),
                pl.BlockSpec((KS, W * C_in, W2 * C_out), lambda n: (0, 0, 0)),
                pl.BlockSpec((H, H2), lambda n: (0, 0)),
                pl.BlockSpec((W2 * C_out, W * C_out), lambda n: (0, 0)),
                pl.BlockSpec((1, W * C_out), lambda n: (0, 0)),
            ],
            out_specs=pl.BlockSpec((1, H, W * C_out), lambda n: (n, 0, 0)),
        ),
        compiler_params=pltpu.CompilerParams(
            dimension_semantics=("parallel",),
            vmem_limit_bytes=32 * 1024 * 1024,
        ),
    )(x2, dh, mw, uh, kuw, bias_row)

    # back to the PyTorch NCHW convention
    out_nhwc = out2.reshape(N, H, W, C_out)
    return jnp.transpose(out_nhwc, (0, 3, 1, 2))


# ---------------------------------------------------------------------------
# Pure-JAX reference of the module forward (for in-script verification).
# ---------------------------------------------------------------------------
def _resize_bilinear_ac_ref(x_nchw, out_h, out_w):
    N, C, H, W = x_nchw.shape
    r0, r1, fr = _interp_coords(out_h, H)
    c0, c1, fc = _interp_coords(out_w, W)
    fr = jnp.asarray(fr, jnp.float32)[None, None, :, None]
    fc = jnp.asarray(fc, jnp.float32)[None, None, None, :]
    rows = x_nchw[:, :, r0, :] * (1.0 - fr) + x_nchw[:, :, r1, :] * fr
    return rows[:, :, :, c0] * (1.0 - fc) + rows[:, :, :, c1] * fc


def _reference(x, w, gamma, beta, running_mean, running_var, eps=1e-5):
    N, C, H, W = x.shape
    out = _resize_bilinear_ac_ref(x, H // 2, W // 2)
    out = jax.lax.conv_general_dilated(
        out, w, window_strides=(1, 1), padding=((1, 1), (1, 1)),
        dimension_numbers=("NCHW", "OIHW", "NCHW"))
    scale = gamma / jnp.sqrt(running_var + eps)
    bias = beta - running_mean * scale
    out = out * scale[None, :, None, None] + bias[None, :, None, None]
    out = _resize_bilinear_ac_ref(out, H, W)
    return jnp.maximum(out, 0.0)


if __name__ == "__main__":
    key = jax.random.PRNGKey(0)
    k_x, k_w, k_g, k_b, k_m, k_v = jax.random.split(key, 6)

    N, C_in, C_out, H, W = 2, 4, 8, 16, 16

    x = jax.random.normal(k_x, (N, C_in, H, W), dtype=jnp.float32)
    w = jax.random.normal(k_w, (C_out, C_in, KS, KS), dtype=jnp.float32) * 0.1
    gamma = 1.0 + 0.1 * jax.random.normal(k_g, (C_out,), dtype=jnp.float32)
    beta = 0.1 * jax.random.normal(k_b, (C_out,), dtype=jnp.float32)
    running_mean = 0.1 * jax.random.normal(k_m, (C_out,), dtype=jnp.float32)
    running_var = jnp.abs(1.0 + 0.1 * jax.random.normal(k_v, (C_out,),
                                                        dtype=jnp.float32))

    out = basic_residual_downup_1x(x, w, gamma, beta, running_mean, running_var)
    out = jax.block_until_ready(out)

    ref = _reference(x, w, gamma, beta, running_mean, running_var)
    np.testing.assert_allclose(np.asarray(out), np.asarray(ref),
                               rtol=1e-4, atol=1e-4)

    print("KERNEL_OK")
</pallas_src>

<mosaic_0001>
module attributes {stable_mosaic.version = 11 : i64} {
  func.func @_downup_conv_bn_relu_kernel(%arg0: i32, %arg1: memref<1x16x64xf32, #tpu.memory_space<vmem>>, %arg2: memref<3x8x16xf32, #tpu.memory_space<vmem>>, %arg3: memref<3x64x64xf32, #tpu.memory_space<vmem>>, %arg4: memref<16x8xf32, #tpu.memory_space<vmem>>, %arg5: memref<64x128xf32, #tpu.memory_space<vmem>>, %arg6: memref<1x128xf32, #tpu.memory_space<vmem>>, %arg7: memref<1x16x128xf32, #tpu.memory_space<vmem>>) attributes {dimension_semantics = [#tpu.dimension_semantics<parallel>], iteration_bounds = array<i64: 2>, scalar_prefetch = 0 : i64, scratch_operands = 0 : i64, tpu.core_type = #tpu.core_type<tc>, window_params = [{transform_indices = @transform_0, window_bounds = array<i64: 1, 16, 64>}, {pipeline_mode = #tpu.pipeline_mode<synchronous>, transform_indices = @transform_1, window_bounds = array<i64: 3, 8, 16>}, {pipeline_mode = #tpu.pipeline_mode<synchronous>, transform_indices = @transform_2, window_bounds = array<i64: 3, 64, 64>}, {pipeline_mode = #tpu.pipeline_mode<synchronous>, transform_indices = @transform_3, window_bounds = array<i64: 16, 8>}, {pipeline_mode = #tpu.pipeline_mode<synchronous>, transform_indices = @transform_4, window_bounds = array<i64: 64, 128>}, {pipeline_mode = #tpu.pipeline_mode<synchronous>, transform_indices = @transform_5, window_bounds = array<i64: 1, 128>}, {transform_indices = @transform_6, window_bounds = array<i64: 1, 16, 128>}]} {
    %c0 = arith.constant 0 : index
    %c0_0 = arith.constant 0 : index
    %c0_1 = arith.constant 0 : index
    %0 = vector.load %arg1[%c0, %c0_0, %c0_1] : memref<1x16x64xf32, #tpu.memory_space<vmem>>, vector<1x16x64xf32>
    %1 = vector.shape_cast %0 : vector<1x16x64xf32> to vector<16x64xf32>
    %cst = arith.constant 0.000000e+00 : f32
    %2 = vector.broadcast %cst : f32 to vector<8x64xf32>
    %c0_2 = arith.constant 0 : index
    %c0_3 = arith.constant 0 : index
    %c0_4 = arith.constant 0 : index
    %3 = vector.load %arg2[%c0_2, %c0_3, %c0_4] : memref<3x8x16xf32, #tpu.memory_space<vmem>>, vector<1x8x16xf32>
    %4 = vector.shape_cast %3 : vector<1x8x16xf32> to vector<8x16xf32>
    %cst_5 = arith.constant dense<0.000000e+00> : vector<8x64xf32>
    %5 = tpu.matmul %4, %1, %cst_5 {dimension_numbers = #tpu.dot_dimension_numbers<[1], [0], [0], [1], [0, 0, 1, 1], [], []>} : vector<8x16xf32>, vector<16x64xf32>, vector<8x64xf32> -> vector<8x64xf32>
    %c0_6 = arith.constant 0 : index
    %c0_7 = arith.constant 0 : index
    %c0_8 = arith.constant 0 : index
    %6 = vector.load %arg3[%c0_6, %c0_7, %c0_8] : memref<3x64x64xf32, #tpu.memory_space<vmem>>, vector<1x64x64xf32>
    %7 = vector.shape_cast %6 : vector<1x64x64xf32> to vector<64x64xf32>
    %cst_9 = arith.constant dense<0.000000e+00> : vector<8x64xf32>
    %8 = tpu.matmul %5, %7, %cst_9 {dimension_numbers = #tpu.dot_dimension_numbers<[1], [0], [0], [1], [0, 0, 1, 1], [], []>} : vector<8x64xf32>, vector<64x64xf32>, vector<8x64xf32> -> vector<8x64xf32>
    %9 = arith.addf %2, %8 : vector<8x64xf32>
    %c1 = arith.constant 1 : index
    %c0_10 = arith.constant 0 : index
    %c0_11 = arith.constant 0 : index
    %10 = vector.load %arg2[%c1, %c0_10, %c0_11] : memref<3x8x16xf32, #tpu.memory_space<vmem>>, vector<1x8x16xf32>
    %11 = vector.shape_cast %10 : vector<1x8x16xf32> to vector<8x16xf32>
    %cst_12 = arith.constant dense<0.000000e+00> : vector<8x64xf32>
    %12 = tpu.matmul %11, %1, %cst_12 {dimension_numbers = #tpu.dot_dimension_numbers<[1], [0], [0], [1], [0, 0, 1, 1], [], []>} : vector<8x16xf32>, vector<16x64xf32>, vector<8x64xf32> -> vector<8x64xf32>
    %c1_13 = arith.constant 1 : index
    %c0_14 = arith.constant 0 : index
    %c0_15 = arith.constant 0 : index
    %13 = vector.load %arg3[%c1_13, %c0_14, %c0_15] : memref<3x64x64xf32, #tpu.memory_space<vmem>>, vector<1x64x64xf32>
    %14 = vector.shape_cast %13 : vector<1x64x64xf32> to vector<64x64xf32>
    %cst_16 = arith.constant dense<0.000000e+00> : vector<8x64xf32>
    %15 = tpu.matmul %12, %14, %cst_16 {dimension_numbers = #tpu.dot_dimension_numbers<[1], [0], [0], [1], [0, 0, 1, 1], [], []>} : vector<8x64xf32>, vector<64x64xf32>, vector<8x64xf32> -> vector<8x64xf32>
    %16 = arith.addf %9, %15 : vector<8x64xf32>
    %c2 = arith.constant 2 : index
    %c0_17 = arith.constant 0 : index
    %c0_18 = arith.constant 0 : index
    %17 = vector.load %arg2[%c2, %c0_17, %c0_18] : memref<3x8x16xf32, #tpu.memory_space<vmem>>, vector<1x8x16xf32>
    %18 = vector.shape_cast %17 : vector<1x8x16xf32> to vector<8x16xf32>
    %cst_19 = arith.constant dense<0.000000e+00> : vector<8x64xf32>
    %19 = tpu.matmul %18, %1, %cst_19 {dimension_numbers = #tpu.dot_dimension_numbers<[1], [0], [0], [1], [0, 0, 1, 1], [], []>} : vector<8x16xf32>, vector<16x64xf32>, vector<8x64xf32> -> vector<8x64xf32>
    %c2_20 = arith.constant 2 : index
    %c0_21 = arith.constant 0 : index
    %c0_22 = arith.constant 0 : index
    %20 = vector.load %arg3[%c2_20, %c0_21, %c0_22] : memref<3x64x64xf32, #tpu.memory_space<vmem>>, vector<1x64x64xf32>
    %21 = vector.shape_cast %20 : vector<1x64x64xf32> to vector<64x64xf32>
    %cst_23 = arith.constant dense<0.000000e+00> : vector<8x64xf32>
    %22 = tpu.matmul %19, %21, %cst_23 {dimension_numbers = #tpu.dot_dimension_numbers<[1], [0], [0], [1], [0, 0, 1, 1], [], []>} : vector<8x64xf32>, vector<64x64xf32>, vector<8x64xf32> -> vector<8x64xf32>
    %23 = arith.addf %16, %22 : vector<8x64xf32>
    %c0_24 = arith.constant 0 : index
    %c0_25 = arith.constant 0 : index
    %24 = vector.load %arg4[%c0_24, %c0_25] : memref<16x8xf32, #tpu.memory_space<vmem>>, vector<16x8xf32>
    %cst_26 = arith.constant dense<0.000000e+00> : vector<16x64xf32>
    %25 = tpu.matmul %24, %23, %cst_26 {dimension_numbers = #tpu.dot_dimension_numbers<[1], [0], [0], [1], [0, 0, 1, 1], [], []>} : vector<16x8xf32>, vector<8x64xf32>, vector<16x64xf32> -> vector<16x64xf32>
    %c0_27 = arith.constant 0 : index
    %c0_28 = arith.constant 0 : index
    %26 = vector.load %arg5[%c0_27, %c0_28] : memref<64x128xf32, #tpu.memory_space<vmem>>, vector<64x128xf32>
    %cst_29 = arith.constant dense<0.000000e+00> : vector<16x128xf32>
    %27 = tpu.matmul %25, %26, %cst_29 {dimension_numbers = #tpu.dot_dimension_numbers<[1], [0], [0], [1], [0, 0, 1, 1], [], []>} : vector<16x64xf32>, vector<64x128xf32>, vector<16x128xf32> -> vector<16x128xf32>
    %c0_30 = arith.constant 0 : index
    %c0_31 = arith.constant 0 : index
    %28 = vector.load %arg6[%c0_30, %c0_31] : memref<1x128xf32, #tpu.memory_space<vmem>>, vector<1x128xf32>
    %29 = vector.broadcast %28 : vector<1x128xf32> to vector<16x128xf32>
    %30 = arith.addf %27, %29 : vector<16x128xf32>
    %cst_32 = arith.constant 0.000000e+00 : f32
    %31 = vector.broadcast %cst_32 : f32 to vector<16x128xf32>
    %32 = arith.maximumf %30, %31 : vector<16x128xf32>
    %33 = vector.shape_cast %32 : vector<16x128xf32> to vector<1x16x128xf32>
    %c0_33 = arith.constant 0 : index
    %c0_34 = arith.constant 0 : index
    %c0_35 = arith.constant 0 : index
    %34 = vector.load %arg7[%c0_33, %c0_34, %c0_35] : memref<1x16x128xf32, #tpu.memory_space<vmem>>, vector<1x16x128xf32>
    tpu.vector_store %arg7[%c0_33, %c0_34, %c0_35], %33 {strides = array<i32>} : memref<1x16x128xf32, #tpu.memory_space<vmem>>, vector<1x16x128xf32>,
    return
  }
  func.func @transform_0(%arg0: i32) -> (i32, i32, i32) {
    %c0_i32 = arith.constant 0 : i32
    %c0_i32_0 = arith.constant 0 : i32
    %c0_i32_1 = arith.constant 0 : i32
    return %arg0, %c0_i32, %c0_i32_0 : i32, i32, i32
  }
  func.func @transform_1(%arg0: i32) -> (i32, i32, i32) {
    %c0_i32 = arith.constant 0 : i32
    %c0_i32_0 = arith.constant 0 : i32
    %c0_i32_1 = arith.constant 0 : i32
    %c0_i32_2 = arith.constant 0 : i32
    return %c0_i32, %c0_i32_0, %c0_i32_1 : i32, i32, i32
  }
  func.func @transform_2(%arg0: i32) -> (i32, i32, i32) {
    %c0_i32 = arith.constant 0 : i32
    %c0_i32_0 = arith.constant 0 : i32
    %c0_i32_1 = arith.constant 0 : i32
    %c0_i32_2 = arith.constant 0 : i32
    return %c0_i32, %c0_i32_0, %c0_i32_1 : i32, i32, i32
  }
  func.func @transform_3(%arg0: i32) -> (i32, i32) {
    %c0_i32 = arith.constant 0 : i32
    %c0_i32_0 = arith.constant 0 : i32
    %c0_i32_1 = arith.constant 0 : i32
    return %c0_i32, %c0_i32_0 : i32, i32
  }
  func.func @transform_4(%arg0: i32) -> (i32, i32) {
    %c0_i32 = arith.constant 0 : i32
    %c0_i32_0 = arith.constant 0 : i32
    %c0_i32_1 = arith.constant 0 : i32
    return %c0_i32, %c0_i32_0 : i32, i32
  }
  func.func @transform_5(%arg0: i32) -> (i32, i32) {
    %c0_i32 = arith.constant 0 : i32
    %c0_i32_0 = arith.constant 0 : i32
    %c0_i32_1 = arith.constant 0 : i32
    return %c0_i32, %c0_i32_0 : i32, i32
  }
  func.func @transform_6(%arg0: i32) -> (i32, i32, i32) {
    %c0_i32 = arith.constant 0 : i32
    %c0_i32_0 = arith.constant 0 : i32
    %c0_i32_1 = arith.constant 0 : i32
    return %arg0, %c0_i32, %c0_i32_0 : i32, i32, i32
  }
}

</mosaic_0001>

<llo_original>
// kernel: tpu_custom_call.1
$region0: #{tpu_custom_call.1}
  #allocation0 [shape = 'u32[]', space=smem, size = 0x4, offset = 0x4, fixed_abs, tag = 'smem constant byte address 0x4 - core index']
  #allocation1 [shape = 'u32[144,128]{1,0:T(1,128)}', space=vmem, size = 0x12000, scoped, tag = 'internal scratch']
  %s0 = inlined_call_operand.hbm [shape: f32[2,16,64], index: 0, kind: input, shape index: {}]
  %s1 = inlined_call_operand.vmem [shape: f32[3,8,16], index: 1, kind: input, shape index: {}]
  %s2 = inlined_call_operand.hbm [shape: f32[3,64,64], index: 2, kind: input, shape index: {}]
  %s3 = inlined_call_operand.vmem [shape: f32[16,8], index: 3, kind: input, shape index: {}]
  %s4 = inlined_call_operand.hbm [shape: f32[64,128], index: 4, kind: input, shape index: {}]
  %s5 = inlined_call_operand.vmem [shape: f32[1,128], index: 5, kind: input, shape index: {}]
  %s6 = inlined_call_operand.hbm [shape: f32[2,16,128], index: 6, kind: output, shape index: {}]
  %s7 = sld [smem:[#allocation0]]
  $region69: #{tpu_custom_call.1} parent=0
    _
  %s9 = ssub.s32 1, %s7
  %s10 = scalar_select 0, %s9, %s7
  $region1: #{tpu_custom_call.1} parent=0
    #allocation2 [shape = 'u8[16384]{0}', space=vmem, size = 0x4000, scoped, tag = 'input window, operand 0']
    #allocation3 [shape = 's32[2]{0}', space=sflag, size = 0x8, scoped, tag = 'scoped memory for tpu_custom_call.1']
    #allocation4 [shape = 's32[2]{0}', space=sflag, size = 0x8, scoped, tag = 'scoped memory for tpu_custom_call.1']
    #allocation5 [shape = 'u8[98304]{0}', space=vmem, size = 0x18000, scoped, tag = 'input window, operand 2, single buffered']
    #allocation6 [shape = 's32[1]{0}', space=sflag, size = 0x4, scoped, tag = 'scoped memory for tpu_custom_call.1']
    #allocation7 [shape = 'u8[32768]{0}', space=vmem, size = 0x8000, scoped, tag = 'input window, operand 4, single buffered']
    #allocation8 [shape = 'u8[16384]{0}', space=vmem, size = 0x4000, scoped, tag = 'output window, operand 0']
    %11 = vsyncpa [#allocation3], 0
    %s12 = scalar_lea.sflag [#allocation3], 1
    %13 = vsyncpa %s12, 0
    %14 = vsyncpa [#allocation6], 0
    %15 = vsyncpa [#allocation4], 0
    %s16 = scalar_lea.sflag [#allocation4], 1
    %17 = vsyncpa %s16, 0
    loop: start=0, step=1, limit=4
    $region2: #{tpu_custom_call.1} parent=1 // loop_pre_header
      _
    $region3: #{tpu_custom_call.1} parent=1 // loop_header
      %s19 = sphi 0, %s23
      %p20 = scmp.ge.s32.totalorder %s19, 4
      %s29 = sphi 0, %s31
      %s32 = sphi 0, %s29
      %s33 = sphi 0, %s32
      %s49 = sphi 0, %s33
      %s53 = sphi 0, %s53
      %s55 = sphi 0, %s53
      %s56 = sphi 0, %s55
      %s70 = sphi 0, %s56
      %s74 = sphi 0, %s74
      %s76 = sphi 0, %s74
      %s77 = sphi 0, %s76
      %s91 = sphi 0, %s77
      %s95 = sphi 0, %s95
      %s97 = sphi 0, %s95
      %s98 = sphi 0, %s97
      %s112 = sphi 0, %s98
      %s116 = sphi 0, %s116
      %s118 = sphi 0, %s116
      %s119 = sphi 0, %s118
      %s133 = sphi 0, %s119
      %s137 = sphi 0, %s137
      %s139 = sphi 0, %s137
      %s140 = sphi 0, %s139
      %s154 = sphi 0, %s140
      %s160 = sphi 0, %s162
      %s163 = sphi 0, %s160
      %s164 = sphi 0, %s163
      %s180 = sphi 0, %s164
    $region4: #{tpu_custom_call.1} parent=1 // loop_header_branch
      %22 = sbr.rel (%p20) target = $region8
    $region5: #{tpu_custom_call.1} parent=1 // loop_body
      %s24 = ssub.s32 %s19, 1
      %s25 = ssub.s32 %s19, 2
      %s26 = sadd.s32 %s19, 1
      %s27 = ssub.s32 %s19, %s26
      %p28 = scmp.eq.s32.totalorder %s27, 0
      %s30 = sadd.s32 %s29, 1
      %s31 = scalar_select %p28, %s29, %s30
      %p34 = pneg %p28
      %p35 = scmp.eq.s32.totalorder %s19, 1
      %p36 = por %p34, %p35
      %p37 = scmp.ne.s32.totalorder %s29, %s32
      %p38 = scmp.eq.s32.totalorder %s19, 0
      %p39 = por %p37, %p38
      %p40 = scmp.ne.s32.totalorder %s29, %s32
      %p41 = scmp.eq.s32.totalorder %s24, 1
      %p42 = por %p40, %p41
      %p43 = scmp.ne.s32.totalorder %s32, %s33
      %p44 = scmp.eq.s32.totalorder %s24, 0
      %p45 = por %p43, %p44
      %p46 = scmp.ne.s32.totalorder %s32, %s33
      %p47 = scmp.eq.s32.totalorder %s25, 1
      %p48 = por %p46, %p47
      %p50 = scmp.ne.s32.totalorder %s33, %s49
      %p51 = scmp.eq.s32.totalorder %s25, 0
      %p52 = por %p50, %p51
      %s54 = sadd.s32 %s53, 1
      %p57 = scmp.eq.s32.totalorder %s19, 1
      %p58 = scmp.ne.s32.totalorder %s53, %s55
      %p59 = scmp.eq.s32.totalorder %s19, 0
      %p60 = por %p58, %p59
      %p61 = scmp.ne.s32.totalorder %s53, %s55
      %p62 = scmp.eq.s32.totalorder %s24, 1
      %p63 = por %p61, %p62
      %p64 = scmp.ne.s32.totalorder %s55, %s56
      %p65 = scmp.eq.s32.totalorder %s24, 0
      %p66 = por %p64, %p65
      %p67 = scmp.ne.s32.totalorder %s55, %s56
      %p68 = scmp.eq.s32.totalorder %s25, 1
      %p69 = por %p67, %p68
      %p71 = scmp.ne.s32.totalorder %s56, %s70
      %p72 = scmp.eq.s32.totalorder %s25, 0
      %p73 = por %p71, %p72
      %s75 = sadd.s32 %s74, 1
      %p78 = scmp.eq.s32.totalorder %s19, 1
      %p79 = scmp.ne.s32.totalorder %s74, %s76
      %p80 = scmp.eq.s32.totalorder %s19, 0
      %p81 = por %p79, %p80
      %p82 = scmp.ne.s32.totalorder %s74, %s76
      %p83 = scmp.eq.s32.totalorder %s24, 1
      %p84 = por %p82, %p83
      %p85 = scmp.ne.s32.totalorder %s76, %s77
      %p86 = scmp.eq.s32.totalorder %s24, 0
      %p87 = por %p85, %p86
      %p88 = scmp.ne.s32.totalorder %s76, %s77
      %p89 = scmp.eq.s32.totalorder %s25, 1
      %p90 = por %p88, %p89
      %p92 = scmp.ne.s32.totalorder %s77, %s91
      %p93 = scmp.eq.s32.totalorder %s25, 0
      %p94 = por %p92, %p93
      %s96 = sadd.s32 %s95, 1
      %p99 = scmp.eq.s32.totalorder %s19, 1
      %p100 = scmp.ne.s32.totalorder %s95, %s97
      %p101 = scmp.eq.s32.totalorder %s19, 0
      %p102 = por %p100, %p101
      %p103 = scmp.ne.s32.totalorder %s95, %s97
      %p104 = scmp.eq.s32.totalorder %s24, 1
      %p105 = por %p103, %p104
      %p106 = scmp.ne.s32.totalorder %s97, %s98
      %p107 = scmp.eq.s32.totalorder %s24, 0
      %p108 = por %p106, %p107
      %p109 = scmp.ne.s32.totalorder %s97, %s98
      %p110 = scmp.eq.s32.totalorder %s25, 1
      %p111 = por %p109, %p110
      %p113 = scmp.ne.s32.totalorder %s98, %s112
      %p114 = scmp.eq.s32.totalorder %s25, 0
      %p115 = por %p113, %p114
      %s117 = sadd.s32 %s116, 1
      %p120 = scmp.eq.s32.totalorder %s19, 1
      %p121 = scmp.ne.s32.totalorder %s116, %s118
      %p122 = scmp.eq.s32.totalorder %s19, 0
      %p123 = por %p121, %p122
      %p124 = scmp.ne.s32.totalorder %s116, %s118
      %p125 = scmp.eq.s32.totalorder %s24, 1
      %p126 = por %p124, %p125
      %p127 = scmp.ne.s32.totalorder %s118, %s119
      %p128 = scmp.eq.s32.totalorder %s24, 0
      %p129 = por %p127, %p128
      %p130 = scmp.ne.s32.totalorder %s118, %s119
      %p131 = scmp.eq.s32.totalorder %s25, 1
      %p132 = por %p130, %p131
      %p134 = scmp.ne.s32.totalorder %s119, %s133
      %p135 = scmp.eq.s32.totalorder %s25, 0
      %p136 = por %p134, %p135
      %s138 = sadd.s32 %s137, 1
      %p141 = scmp.eq.s32.totalorder %s19, 1
      %p142 = scmp.ne.s32.totalorder %s137, %s139
      %p143 = scmp.eq.s32.totalorder %s19, 0
      %p144 = por %p142, %p143
      %p145 = scmp.ne.s32.totalorder %s137, %s139
      %p146 = scmp.eq.s32.totalorder %s24, 1
      %p147 = por %p145, %p146
      %p148 = scmp.ne.s32.totalorder %s139, %s140
      %p149 = scmp.eq.s32.totalorder %s24, 0
      %p150 = por %p148, %p149
      %p151 = scmp.ne.s32.totalorder %s139, %s140
      %p152 = scmp.eq.s32.totalorder %s25, 1
      %p153 = por %p151, %p152
      %p155 = scmp.ne.s32.totalorder %s140, %s154
      %p156 = scmp.eq.s32.totalorder %s25, 0
      %p157 = por %p155, %p156
      %s158 = ssub.s32 %s19, %s26
      %p159 = scmp.eq.s32.totalorder %s158, 0
      %s161 = sadd.s32 %s160, 1
      %s162 = scalar_select %p159, %s160, %s161
      %p165 = pneg %p159
      %p166 = scmp.eq.s32.totalorder %s19, 1
      %p167 = por %p165, %p166
      %p168 = scmp.ne.s32.totalorder %s160, %s163
      %p169 = scmp.eq.s32.totalorder %s19, 0
      %p170 = por %p168, %p169
      %p171 = scmp.ne.s32.totalorder %s160, %s163
      %p172 = scmp.eq.s32.totalorder %s24, 1
      %p173 = por %p171, %p172
      %p174 = scmp.ne.s32.totalorder %s163, %s164
      %p175 = scmp.eq.s32.totalorder %s24, 0
      %p176 = por %p174, %p175
      %p177 = scmp.ne.s32.totalorder %s163, %s164
      %p178 = scmp.eq.s32.totalorder %s25, 1
      %p179 = por %p177, %p178
      %p181 = scmp.ne.s32.totalorder %s164, %s180
      %p182 = scmp.eq.s32.totalorder %s25, 0
      %p183 = por %p181, %p182
      %p184 = scmp.le.s32.totalorder 1, %s19
      %p185 = scmp.lt.s32.totalorder %s19, 3
      %p186 = pnand %p184, %p185
      %p187 = pneg %p186
      // Predicated region
      $region9: #{tpu_custom_call.1} parent=5 // pred_check
        _
      $region10: #{tpu_custom_call.1} parent=5 // pred_check_branch
        %189 = sbr.rel (%p186) target = $region12
      $region11: #{tpu_custom_call.1} parent=5 // pred_region
        %s190 = ssub.s32 %s19, 1
        // Predicated region
        $region13: #{tpu_custom_call.1} parent=11 // pred_check
          %p191 = pneg %p66
        $region14: #{tpu_custom_call.1} parent=11 // pred_check_branch
          %193 = sbr.rel (%p191) target = $region16
        $region15: #{tpu_custom_call.1} parent=11 // pred_region
          _
        $region16: #{tpu_custom_call.1} parent=11 // pred_fallthru
          _
        // Predicated region
        $region17: #{tpu_custom_call.1} parent=11 // pred_check
          %p194 = pneg %p87
        $region18: #{tpu_custom_call.1} parent=11 // pred_check_branch
          %196 = sbr.rel (%p194) target = $region20
        $region19: #{tpu_custom_call.1} parent=11 // pred_region
          %s198 = ssub.s32 3072, 3072
          %199 = vsyncadd [#allocation6], %s198
          %s200 = sshll.u32 [#allocation5], 4
          %s201 = int_to_ptr.vmem [resolvable:$true] %s200
          %206 = dma.hbm_to_vmem [thread:$0]  %s2, 3072, %s201, [#allocation6], 128, 128, 8
        $region20: #{tpu_custom_call.1} parent=11 // pred_fallthru
          _
        // Predicated region
        $region21: #{tpu_custom_call.1} parent=11 // pred_check
          %p207 = pneg %p108
        $region22: #{tpu_custom_call.1} parent=11 // pred_check_branch
          %209 = sbr.rel (%p207) target = $region24
        $region23: #{tpu_custom_call.1} parent=11 // pred_region
          _
        $region24: #{tpu_custom_call.1} parent=11 // pred_fallthru
          _
        // Predicated region
        $region25: #{tpu_custom_call.1} parent=11 // pred_check
          %p210 = pneg %p129
        $region26: #{tpu_custom_call.1} parent=11 // pred_check_branch
          %212 = sbr.rel (%p210) target = $region28
        $region27: #{tpu_custom_call.1} parent=11 // pred_region
          %s214 = ssub.s32 1024, 1024
          %215 = vsyncadd [#allocation6], %s214
          %s216 = sshll.u32 [#allocation7], 4
          %s217 = int_to_ptr.vmem [resolvable:$true] %s216
          %222 = dma.hbm_to_vmem [thread:$0]  %s4, 1024, %s217, [#allocation6], 128, 128, 8
        $region28: #{tpu_custom_call.1} parent=11 // pred_fallthru
          _
        // Predicated region
        $region29: #{tpu_custom_call.1} parent=11 // pred_check
          %p223 = pneg %p150
        $region30: #{tpu_custom_call.1} parent=11 // pred_check_branch
          %225 = sbr.rel (%p223) target = $region32
        $region31: #{tpu_custom_call.1} parent=11 // pred_region
          _
        $region32: #{tpu_custom_call.1} parent=11 // pred_fallthru
          _
      $region12: #{tpu_custom_call.1} parent=5 // pred_fallthru
        _
      %p226 = scmp.lt.s32.totalorder %s19, 2
      // Predicated region
      $region33: #{tpu_custom_call.1} parent=5 // pred_check
        %p227 = pneg %p226
      $region34: #{tpu_custom_call.1} parent=5 // pred_check_branch
        %229 = sbr.rel (%p227) target = $region36
      $region35: #{tpu_custom_call.1} parent=5 // pred_region
        // Predicated region
        $region37: #{tpu_custom_call.1} parent=35 // pred_check
          %p230 = pneg %p39
        $region38: #{tpu_custom_call.1} parent=35 // pred_check_branch
          %232 = sbr.rel (%p230) target = $region40
        $region39: #{tpu_custom_call.1} parent=35 // pred_region
          %s233 = sand.u32 %s29, 1
          %s234 = scalar_lea.sflag [#allocation3], %s233
          %s235 = sand.u32 %s29, 1
          %s236 = smul.addr %s235, 16
          %s237 = scalar_lea.vmem [#allocation2], %s236
          %s239 = ssub.s32 256, 256
          %240 = vsyncadd %s234, %s239
          %s241 = smul.addr %s19, 2
          %s242 = smul.addr %s241, 128
          %s243 = scalar_lea.hbm %s0, %s242
          %s244 = sshll.u32 %s237, 4
          %s245 = int_to_ptr.vmem [resolvable:$true] %s244
          %250 = dma.hbm_to_vmem [thread:$0]  %s243, 256, %s245, %s234, 128, 128, 8
        $region40: #{tpu_custom_call.1} parent=35 // pred_fallthru
          _
      $region36: #{tpu_custom_call.1} parent=5 // pred_fallthru
        _
      %p251 = scmp.le.s32.totalorder 1, %s19
      %p252 = scmp.lt.s32.totalorder %s19, 3
      %p253 = pnand %p251, %p252
      %p254 = pneg %p253
      // Predicated region
      $region41: #{tpu_custom_call.1} parent=5 // pred_check
        _
      $region42: #{tpu_custom_call.1} parent=5 // pred_check_branch
        %256 = sbr.rel (%p253) target = $region44
      $region43: #{tpu_custom_call.1} parent=5 // pred_region
        %s257 = ssub.s32 %s19, 1
        %s258 = sand.u32 %s32, 1
        %s259 = scalar_lea.sflag [#allocation3], %s258
        %s260 = sand.u32 %s32, 1
        %s261 = smul.addr %s260, 16
        %s262 = scalar_lea.vmem [#allocation2], %s261
        // Predicated region
        $region45: #{tpu_custom_call.1} parent=43 // pred_check
          %p263 = pneg %p45
        $region46: #{tpu_custom_call.1} parent=43 // pred_check_branch
          %265 = sbr.rel (%p263) target = $region48
        $region47: #{tpu_custom_call.1} parent=43 // pred_region
          %266 = dma.done %s259, 256
        $region48: #{tpu_custom_call.1} parent=43 // pred_fallthru
          _
        // Predicated region
        $region49: #{tpu_custom_call.1} parent=43 // pred_check
          %p267 = pneg %p87
        $region50: #{tpu_custom_call.1} parent=43 // pred_check_branch
          %269 = sbr.rel (%p267) target = $region52
        $region51: #{tpu_custom_call.1} parent=43 // pred_region
          %270 = dma.done [#allocation6], 3072
        $region52: #{tpu_custom_call.1} parent=43 // pred_fallthru
          _
        // Predicated region
        $region53: #{tpu_custom_call.1} parent=43 // pred_check
          %p271 = pneg %p129
        $region54: #{tpu_custom_call.1} parent=43 // pred_check_branch
          %273 = sbr.rel (%p271) target = $region56
        $region55: #{tpu_custom_call.1} parent=43 // pred_region
          %274 = dma.done [#allocation6], 1024
        $region56: #{tpu_custom_call.1} parent=43 // pred_fallthru
          _
        %s275 = sand.u32 %s32, 1
        %s276 = scalar_lea.sflag [#allocation3], %s275
        %s277 = sand.u32 %s32, 1
        %s278 = smul.addr %s277, 16
        %s279 = scalar_lea.vmem [#allocation2], %s278
        %p280 = pneg %p45
        %p281 = pneg %p42
        %p282 = pneg %p66
        %p283 = pneg %p63
        %p284 = pneg %p87
        %p285 = pneg %p84
        %p286 = pneg %p108
        %p287 = pneg %p105
        %p288 = pneg %p129
        %p289 = pneg %p126
        %p290 = pneg %p150
        %p291 = pneg %p147
        %p292 = pneg %p176
        %p293 = pneg %p173
        %s294 = sand.u32 %s163, 1
        %s295 = scalar_lea.sflag [#allocation4], %s294
        %s296 = sand.u32 %s163, 1
        %s297 = smul.addr %s296, 16
        %s298 = scalar_lea.vmem [#allocation8], %s297
        %v299 = vld [vmem:[%s262] sm:$0xff]
        %v300 = vld [vmem:[%s262 + $0x8] sm:$0xff]
        %v301 = vld [vmem:[%s1] sm:$0xff]
        %vm302 = vcmask 130048
        %v304 = vsel %vm302, %v301, 0
        %306 = vmatprep.subr.mxu0 0.0
        %307 = vmatpush1.msra.mxu0 0.0
        %308 = vmatprep.subr.mxu0 0.0
        %309 = vmatpush1.msra.mxu0 0.0
        %310 = vmatprep.subr.mxu0 0.0
        %311 = vmatpush1.msra.mxu0 0.0
        %312 = vmatprep.subr.mxu0 0.0
        %313 = vmatpush1.msra.mxu0 0.0
        %314 = vmatprep.subr.mxu0 0.0
        %315 = vmatpush1.msra.mxu0 0.0
        %316 = vmatprep.subr.mxu0 0.0
        %317 = vmatpush1.msra.mxu0 0.0
        %318 = vmatprep.subr.mxu0 0.0
        %319 = vmatpush1.msra.mxu0 0.0
        %320 = vmatprep.subr.mxu0 0.0
        %321 = vmatpush1.msra.mxu0 0.0
        %322 = vmatprep.subr.mxu0 0.0
        %323 = vmatpush1.msra.mxu0 0.0
        %324 = vmatprep.subr.mxu0 0.0
        %325 = vmatpush1.msra.mxu0 0.0
        %326 = vmatprep.subr.mxu0 0.0
        %327 = vmatpush1.msra.mxu0 0.0
        %328 = vmatprep.subr.mxu0 0.0
        %329 = vmatpush1.msra.mxu0 0.0
        %330 = vmatprep.subr.mxu0 0.0
        %331 = vmatpush1.msra.mxu0 0.0
        %332 = vmatprep.subr.mxu0 0.0
        %333 = vmatpush1.msra.mxu0 0.0
        %334 = vmatprep.subr.mxu0 0.0
        %335 = vmatpush1.msra.mxu0 %v300
        %336 = vmatprep.subr.mxu0 0.0
        %337 = vmatpush1.msra.mxu0 %v299
        %338 = vmatprep.subr.mxu0 0.0
        %339 = vmatpush2.msra.mxu0 0.0
        %340 = vmatprep.subr.mxu0 0.0
        %341 = vmatpush2.msra.mxu0 0.0
        %342 = vmatprep.subr.mxu0 0.0
        %343 = vmatpush2.msra.mxu0 0.0
        %344 = vmatprep.subr.mxu0 0.0
        %345 = vmatpush2.msra.mxu0 0.0
        %346 = vmatprep.subr.mxu0 0.0
        %347 = vmatpush2.msra.mxu0 0.0
        %348 = vmatprep.subr.mxu0 0.0
        %349 = vmatpush2.msra.mxu0 0.0
        %350 = vmatprep.subr.mxu0 0.0
        %351 = vmatpush2.msra.mxu0 0.0
        %352 = vmatprep.subr.mxu0 0.0
        %353 = vmatpush2.msra.mxu0 0.0
        %354 = vmatprep.subr.mxu0 0.0
        %355 = vmatpush2.msra.mxu0 0.0
        %356 = vmatprep.subr.mxu0 0.0
        %357 = vmatpush2.msra.mxu0 0.0
        %358 = vmatprep.subr.mxu0 0.0
        %359 = vmatpush2.msra.mxu0 0.0
        %360 = vmatprep.subr.mxu0 0.0
        %361 = vmatpush2.msra.mxu0 0.0
        %362 = vmatprep.subr.mxu0 0.0
        %363 = vmatpush2.msra.mxu0 0.0
        %364 = vmatprep.subr.mxu0 0.0
        %365 = vmatpush2.msra.mxu0 0.0
        %366 = vmatprep.subr.mxu0 0.0
        %367 = vmatpush2.msra.mxu0 0.0
        %368 = vmatprep.subr.mxu0 0.0
        %369 = vmatpush2.msra.mxu0 0.0
        %370 = vmatprep.mubr.f32.mxu0 0.0
        %371 = vmatmul.mubr.f32.gmra.mxu0 %v304
        %v372 = vpop.f32.mrf.mxu0
        %v373 = vadd.f32 0.0, %v372
        %v374 = vpop.f32.mrf.mxu0
        %375 = vdwg.mxu0
        %v376 = vld [vmem:[#allocation5] sm:$0xff]
        %v377 = vld [vmem:[#allocation5 + $0x8] sm:$0xff]
        %v378 = vld [vmem:[#allocation5 + $0x10] sm:$0xff]
        %v379 = vld [vmem:[#allocation5 + $0x18] sm:$0xff]
        %v380 = vld [vmem:[#allocation5 + $0x20] sm:$0xff]
        %v381 = vld [vmem:[#allocation5 + $0x28] sm:$0xff]
        %v382 = vld [vmem:[#allocation5 + $0x30] sm:$0xff]
        %v383 = vld [vmem:[#allocation5 + $0x38] sm:$0xff]
        %s384 = scalar_lea.vmem %s1, 8
        %v385 = vld [vmem:[%s384] sm:$0xff]
        %v387 = vsel %vm302, %v385, 0
        %389 = vmatprep.subr.mxu0 0.0
        %390 = vmatpush1.msra.mxu0 0.0
        %391 = vmatprep.subr.mxu0 0.0
        %392 = vmatpush1.msra.mxu0 0.0
        %393 = vmatprep.subr.mxu0 0.0
        %394 = vmatpush1.msra.mxu0 0.0
        %395 = vmatprep.subr.mxu0 0.0
        %396 = vmatpush1.msra.mxu0 0.0
        %397 = vmatprep.subr.mxu0 0.0
        %398 = vmatpush1.msra.mxu0 0.0
        %399 = vmatprep.subr.mxu0 0.0
        %400 = vmatpush1.msra.mxu0 0.0
        %401 = vmatprep.subr.mxu0 0.0
        %402 = vmatpush1.msra.mxu0 0.0
        %403 = vmatprep.subr.mxu0 0.0
        %404 = vmatpush1.msra.mxu0 0.0
        %405 = vmatprep.subr.mxu0 0.0
        %406 = vmatpush1.msra.mxu0 0.0
        %407 = vmatprep.subr.mxu0 0.0
        %408 = vmatpush1.msra.mxu0 0.0
        %409 = vmatprep.subr.mxu0 0.0
        %410 = vmatpush1.msra.mxu0 0.0
        %411 = vmatprep.subr.mxu0 0.0
        %412 = vmatpush1.msra.mxu0 0.0
        %413 = vmatprep.subr.mxu0 0.0
        %414 = vmatpush1.msra.mxu0 0.0
        %415 = vmatprep.subr.mxu0 0.0
        %416 = vmatpush1.msra.mxu0 0.0
        %417 = vmatprep.subr.mxu0 0.0
        %418 = vmatpush1.msra.mxu0 %v300
        %419 = vmatprep.subr.mxu0 0.0
        %420 = vmatpush1.msra.mxu0 %v299
        %421 = vmatprep.subr.mxu0 0.0
        %422 = vmatpush2.msra.mxu0 0.0
        %423 = vmatprep.subr.mxu0 0.0
        %424 = vmatpush2.msra.mxu0 0.0
        %425 = vmatprep.subr.mxu0 0.0
        %426 = vmatpush2.msra.mxu0 0.0
        %427 = vmatprep.subr.mxu0 0.0
        %428 = vmatpush2.msra.mxu0 0.0
        %429 = vmatprep.subr.mxu0 0.0
        %430 = vmatpush2.msra.mxu0 0.0
        %431 = vmatprep.subr.mxu0 0.0
        %432 = vmatpush2.msra.mxu0 0.0
        %433 = vmatprep.subr.mxu0 0.0
        %434 = vmatpush2.msra.mxu0 0.0
        %435 = vmatprep.subr.mxu0 0.0
        %436 = vmatpush2.msra.mxu0 0.0
        %437 = vmatprep.subr.mxu0 0.0
        %438 = vmatpush2.msra.mxu0 0.0
        %439 = vmatprep.subr.mxu0 0.0
        %440 = vmatpush2.msra.mxu0 0.0
        %441 = vmatprep.subr.mxu0 0.0
        %442 = vmatpush2.msra.mxu0 0.0
        %443 = vmatprep.subr.mxu0 0.0
        %444 = vmatpush2.msra.mxu0 0.0
        %445 = vmatprep.subr.mxu0 0.0
        %446 = vmatpush2.msra.mxu0 0.0
        %447 = vmatprep.subr.mxu0 0.0
        %448 = vmatpush2.msra.mxu0 0.0
        %449 = vmatprep.subr.mxu0 0.0
        %450 = vmatpush2.msra.mxu0 0.0
        %451 = vmatprep.subr.mxu0 0.0
        %452 = vmatpush2.msra.mxu0 0.0
        %453 = vmatprep.mubr.f32.mxu0 0.0
        %454 = vmatmul.mubr.f32.gmra.mxu0 %v387
        %v455 = vpop.f32.mrf.mxu0
        %v456 = vadd.f32 0.0, %v455
        %v457 = vpop.f32.mrf.mxu0
        %458 = vdwg.mxu0
        %s459 = scalar_lea.vmem [#allocation5], 64
        %v460 = vld [vmem:[%s459] sm:$0xff]
        %v461 = vld [vmem:[%s459 + $0x8] sm:$0xff]
        %v462 = vld [vmem:[%s459 + $0x10] sm:$0xff]
        %v463 = vld [vmem:[%s459 + $0x18] sm:$0xff]
        %v464 = vld [vmem:[%s459 + $0x20] sm:$0xff]
        %v465 = vld [vmem:[%s459 + $0x28] sm:$0xff]
        %v466 = vld [vmem:[%s459 + $0x30] sm:$0xff]
        %v467 = vld [vmem:[%s459 + $0x38] sm:$0xff]
        %vm468 = vcmask 523264
        %v470 = vsel %vm468, %v456, 0
        %472 = vmatprep.subr.mxu0 0.0
        %473 = vmatpush1.msra.mxu0 0.0
        %474 = vmatprep.subr.mxu0 0.0
        %475 = vmatpush1.msra.mxu0 0.0
        %476 = vmatprep.subr.mxu0 0.0
        %477 = vmatpush1.msra.mxu0 0.0
        %478 = vmatprep.subr.mxu0 0.0
        %479 = vmatpush1.msra.mxu0 0.0
        %480 = vmatprep.subr.mxu0 0.0
        %481 = vmatpush1.msra.mxu0 0.0
        %482 = vmatprep.subr.mxu0 0.0
        %483 = vmatpush1.msra.mxu0 0.0
        %484 = vmatprep.subr.mxu0 0.0
        %485 = vmatpush1.msra.mxu0 0.0
        %486 = vmatprep.subr.mxu0 0.0
        %487 = vmatpush1.msra.mxu0 0.0
        %488 = vmatprep.subr.mxu0 0.0
        %489 = vmatpush1.msra.mxu0 %v467
        %490 = vmatprep.subr.mxu0 0.0
        %491 = vmatpush1.msra.mxu0 %v466
        %492 = vmatprep.subr.mxu0 0.0
        %493 = vmatpush1.msra.mxu0 %v465
        %494 = vmatprep.subr.mxu0 0.0
        %495 = vmatpush1.msra.mxu0 %v464
        %496 = vmatprep.subr.mxu0 0.0
        %497 = vmatpush1.msra.mxu0 %v463
        %498 = vmatprep.subr.mxu0 0.0
        %499 = vmatpush1.msra.mxu0 %v462
        %500 = vmatprep.subr.mxu0 0.0
        %501 = vmatpush1.msra.mxu0 %v461
        %502 = vmatprep.subr.mxu0 0.0
        %503 = vmatpush1.msra.mxu0 %v460
        %504 = vmatprep.subr.mxu0 0.0
        %505 = vmatpush2.msra.mxu0 0.0
        %506 = vmatprep.subr.mxu0 0.0
        %507 = vmatpush2.msra.mxu0 0.0
        %508 = vmatprep.subr.mxu0 0.0
        %509 = vmatpush2.msra.mxu0 0.0
        %510 = vmatprep.subr.mxu0 0.0
        %511 = vmatpush2.msra.mxu0 0.0
        %512 = vmatprep.subr.mxu0 0.0
        %513 = vmatpush2.msra.mxu0 0.0
        %514 = vmatprep.subr.mxu0 0.0
        %515 = vmatpush2.msra.mxu0 0.0
        %516 = vmatprep.subr.mxu0 0.0
        %517 = vmatpush2.msra.mxu0 0.0
        %518 = vmatprep.subr.mxu0 0.0
        %519 = vmatpush2.msra.mxu0 0.0
        %520 = vmatprep.subr.mxu0 0.0
        %521 = vmatpush2.msra.mxu0 0.0
        %522 = vmatprep.subr.mxu0 0.0
        %523 = vmatpush2.msra.mxu0 0.0
        %524 = vmatprep.subr.mxu0 0.0
        %525 = vmatpush2.msra.mxu0 0.0
        %526 = vmatprep.subr.mxu0 0.0
        %527 = vmatpush2.msra.mxu0 0.0
        %528 = vmatprep.subr.mxu0 0.0
        %529 = vmatpush2.msra.mxu0 0.0
        %530 = vmatprep.subr.mxu0 0.0
        %531 = vmatpush2.msra.mxu0 0.0
        %532 = vmatprep.subr.mxu0 0.0
        %533 = vmatpush2.msra.mxu0 0.0
        %534 = vmatprep.subr.mxu0 0.0
        %535 = vmatpush2.msra.mxu0 0.0
        %536 = vmatprep.mubr.f32.mxu0 0.0
        %537 = vmatmul.mubr.f32.gmra.mxu0 %v470
        %v538 = vpop.f32.mrf.mxu0
        %v539 = vadd.f32 0.0, %v538
        %v540 = vpop.f32.mrf.mxu0
        %541 = vdwg.mxu0
        %v543 = vsel %vm468, %v373, 0
        %545 = vmatprep.subr.mxu0 0.0
        %546 = vmatpush1.msra.mxu0 0.0
        %547 = vmatprep.subr.mxu0 0.0
        %548 = vmatpush1.msra.mxu0 0.0
        %549 = vmatprep.subr.mxu0 0.0
        %550 = vmatpush1.msra.mxu0 0.0
        %551 = vmatprep.subr.mxu0 0.0
        %552 = vmatpush1.msra.mxu0 0.0
        %553 = vmatprep.subr.mxu0 0.0
        %554 = vmatpush1.msra.mxu0 0.0
        %555 = vmatprep.subr.mxu0 0.0
        %556 = vmatpush1.msra.mxu0 0.0
        %557 = vmatprep.subr.mxu0 0.0
        %558 = vmatpush1.msra.mxu0 0.0
        %559 = vmatprep.subr.mxu0 0.0
        %560 = vmatpush1.msra.mxu0 0.0
        %561 = vmatprep.subr.mxu0 0.0
        %562 = vmatpush1.msra.mxu0 %v383
        %563 = vmatprep.subr.mxu0 0.0
        %564 = vmatpush1.msra.mxu0 %v382
        %565 = vmatprep.subr.mxu0 0.0
        %566 = vmatpush1.msra.mxu0 %v381
        %567 = vmatprep.subr.mxu0 0.0
        %568 = vmatpush1.msra.mxu0 %v380
        %569 = vmatprep.subr.mxu0 0.0
        %570 = vmatpush1.msra.mxu0 %v379
        %571 = vmatprep.subr.mxu0 0.0
        %572 = vmatpush1.msra.mxu0 %v378
        %573 = vmatprep.subr.mxu0 0.0
        %574 = vmatpush1.msra.mxu0 %v377
        %575 = vmatprep.subr.mxu0 0.0
        %576 = vmatpush1.msra.mxu0 %v376
        %577 = vmatprep.subr.mxu0 0.0
        %578 = vmatpush2.msra.mxu0 0.0
        %579 = vmatprep.subr.mxu0 0.0
        %580 = vmatpush2.msra.mxu0 0.0
        %581 = vmatprep.subr.mxu0 0.0
        %582 = vmatpush2.msra.mxu0 0.0
        %583 = vmatprep.subr.mxu0 0.0
        %584 = vmatpush2.msra.mxu0 0.0
        %585 = vmatprep.subr.mxu0 0.0
        %586 = vmatpush2.msra.mxu0 0.0
        %587 = vmatprep.subr.mxu0 0.0
        %588 = vmatpush2.msra.mxu0 0.0
        %589 = vmatprep.subr.mxu0 0.0
        %590 = vmatpush2.msra.mxu0 0.0
        %591 = vmatprep.subr.mxu0 0.0
        %592 = vmatpush2.msra.mxu0 0.0
        %593 = vmatprep.subr.mxu0 0.0
        %594 = vmatpush2.msra.mxu0 0.0
        %595 = vmatprep.subr.mxu0 0.0
        %596 = vmatpush2.msra.mxu0 0.0
        %597 = vmatprep.subr.mxu0 0.0
        %598 = vmatpush2.msra.mxu0 0.0
        %599 = vmatprep.subr.mxu0 0.0
        %600 = vmatpush2.msra.mxu0 0.0
        %601 = vmatprep.subr.mxu0 0.0
        %602 = vmatpush2.msra.mxu0 0.0
        %603 = vmatprep.subr.mxu0 0.0
        %604 = vmatpush2.msra.mxu0 0.0
        %605 = vmatprep.subr.mxu0 0.0
        %606 = vmatpush2.msra.mxu0 0.0
        %607 = vmatprep.subr.mxu0 0.0
        %608 = vmatpush2.msra.mxu0 0.0
        %609 = vmatprep.mubr.f32.mxu0 0.0
        %610 = vmatmul.mubr.f32.gmra.mxu0 %v543
        %v611 = vpop.f32.mrf.mxu0
        %v612 = vadd.f32 %v539, %v611
        %v613 = vpop.f32.mrf.mxu0
        %614 = vdwg.mxu0
        %s615 = scalar_lea.vmem %s1, 16
        %v616 = vld [vmem:[%s615] sm:$0xff]
        %v618 = vsel %vm302, %v616, 0
        %620 = vmatprep.subr.mxu0 0.0
        %621 = vmatpush1.msra.mxu0 0.0
        %622 = vmatprep.subr.mxu0 0.0
        %623 = vmatpush1.msra.mxu0 0.0
        %624 = vmatprep.subr.mxu0 0.0
        %625 = vmatpush1.msra.mxu0 0.0
        %626 = vmatprep.subr.mxu0 0.0
        %627 = vmatpush1.msra.mxu0 0.0
        %628 = vmatprep.subr.mxu0 0.0
        %629 = vmatpush1.msra.mxu0 0.0
        %630 = vmatprep.subr.mxu0 0.0
        %631 = vmatpush1.msra.mxu0 0.0
        %632 = vmatprep.subr.mxu0 0.0
        %633 = vmatpush1.msra.mxu0 0.0
        %634 = vmatprep.subr.mxu0 0.0
        %635 = vmatpush1.msra.mxu0 0.0
        %636 = vmatprep.subr.mxu0 0.0
        %637 = vmatpush1.msra.mxu0 0.0
        %638 = vmatprep.subr.mxu0 0.0
        %639 = vmatpush1.msra.mxu0 0.0
        %640 = vmatprep.subr.mxu0 0.0
        %641 = vmatpush1.msra.mxu0 0.0
        %642 = vmatprep.subr.mxu0 0.0
        %643 = vmatpush1.msra.mxu0 0.0
        %644 = vmatprep.subr.mxu0 0.0
        %645 = vmatpush1.msra.mxu0 0.0
        %646 = vmatprep.subr.mxu0 0.0
        %647 = vmatpush1.msra.mxu0 0.0
        %648 = vmatprep.subr.mxu0 0.0
        %649 = vmatpush1.msra.mxu0 %v300
        %650 = vmatprep.subr.mxu0 0.0
        %651 = vmatpush1.msra.mxu0 %v299
        %652 = vmatprep.subr.mxu0 0.0
        %653 = vmatpush2.msra.mxu0 0.0
        %654 = vmatprep.subr.mxu0 0.0
        %655 = vmatpush2.msra.mxu0 0.0
        %656 = vmatprep.subr.mxu0 0.0
        %657 = vmatpush2.msra.mxu0 0.0
        %658 = vmatprep.subr.mxu0 0.0
        %659 = vmatpush2.msra.mxu0 0.0
        %660 = vmatprep.subr.mxu0 0.0
        %661 = vmatpush2.msra.mxu0 0.0
        %662 = vmatprep.subr.mxu0 0.0
        %663 = vmatpush2.msra.mxu0 0.0
        %664 = vmatprep.subr.mxu0 0.0
        %665 = vmatpush2.msra.mxu0 0.0
        %666 = vmatprep.subr.mxu0 0.0
        %667 = vmatpush2.msra.mxu0 0.0
        %668 = vmatprep.subr.mxu0 0.0
        %669 = vmatpush2.msra.mxu0 0.0
        %670 = vmatprep.subr.mxu0 0.0
        %671 = vmatpush2.msra.mxu0 0.0
        %672 = vmatprep.subr.mxu0 0.0
        %673 = vmatpush2.msra.mxu0 0.0
        %674 = vmatprep.subr.mxu0 0.0
        %675 = vmatpush2.msra.mxu0 0.0
        %676 = vmatprep.subr.mxu0 0.0
        %677 = vmatpush2.msra.mxu0 0.0
        %678 = vmatprep.subr.mxu0 0.0
        %679 = vmatpush2.msra.mxu0 0.0
        %680 = vmatprep.subr.mxu0 0.0
        %681 = vmatpush2.msra.mxu0 0.0
        %682 = vmatprep.subr.mxu0 0.0
        %683 = vmatpush2.msra.mxu0 0.0
        %684 = vmatprep.mubr.f32.mxu0 0.0
        %685 = vmatmul.mubr.f32.gmra.mxu0 %v618
        %v686 = vpop.f32.mrf.mxu0
        %v687 = vadd.f32 0.0, %v686
        %v688 = vpop.f32.mrf.mxu0
        %689 = vdwg.mxu0
        %s690 = scalar_lea.vmem [#allocation5], 128
        %v691 = vld [vmem:[%s690] sm:$0xff]
        %v692 = vld [vmem:[%s690 + $0x8] sm:$0xff]
        %v693 = vld [vmem:[%s690 + $0x10] sm:$0xff]
        %v694 = vld [vmem:[%s690 + $0x18] sm:$0xff]
        %v695 = vld [vmem:[%s690 + $0x20] sm:$0xff]
        %v696 = vld [vmem:[%s690 + $0x28] sm:$0xff]
        %v697 = vld [vmem:[%s690 + $0x30] sm:$0xff]
        %v698 = vld [vmem:[%s690 + $0x38] sm:$0xff]
        %v700 = vsel %vm468, %v687, 0
        %702 = vmatprep.subr.mxu0 0.0
        %703 = vmatpush1.msra.mxu0 0.0
        %704 = vmatprep.subr.mxu0 0.0
        %705 = vmatpush1.msra.mxu0 0.0
        %706 = vmatprep.subr.mxu0 0.0
        %707 = vmatpush1.msra.mxu0 0.0
        %708 = vmatprep.subr.mxu0 0.0
        %709 = vmatpush1.msra.mxu0 0.0
        %710 = vmatprep.subr.mxu0 0.0
        %711 = vmatpush1.msra.mxu0 0.0
        %712 = vmatprep.subr.mxu0 0.0
        %713 = vmatpush1.msra.mxu0 0.0
        %714 = vmatprep.subr.mxu0 0.0
        %715 = vmatpush1.msra.mxu0 0.0
        %716 = vmatprep.subr.mxu0 0.0
        %717 = vmatpush1.msra.mxu0 0.0
        %718 = vmatprep.subr.mxu0 0.0
        %719 = vmatpush1.msra.mxu0 %v698
        %720 = vmatprep.subr.mxu0 0.0
        %721 = vmatpush1.msra.mxu0 %v697
        %722 = vmatprep.subr.mxu0 0.0
        %723 = vmatpush1.msra.mxu0 %v696
        %724 = vmatprep.subr.mxu0 0.0
        %725 = vmatpush1.msra.mxu0 %v695
        %726 = vmatprep.subr.mxu0 0.0
        %727 = vmatpush1.msra.mxu0 %v694
        %728 = vmatprep.subr.mxu0 0.0
        %729 = vmatpush1.msra.mxu0 %v693
        %730 = vmatprep.subr.mxu0 0.0
        %731 = vmatpush1.msra.mxu0 %v692
        %732 = vmatprep.subr.mxu0 0.0
        %733 = vmatpush1.msra.mxu0 %v691
        %734 = vmatprep.subr.mxu0 0.0
        %735 = vmatpush2.msra.mxu0 0.0
        %736 = vmatprep.subr.mxu0 0.0
        %737 = vmatpush2.msra.mxu0 0.0
        %738 = vmatprep.subr.mxu0 0.0
        %739 = vmatpush2.msra.mxu0 0.0
        %740 = vmatprep.subr.mxu0 0.0
        %741 = vmatpush2.msra.mxu0 0.0
        %742 = vmatprep.subr.mxu0 0.0
        %743 = vmatpush2.msra.mxu0 0.0
        %744 = vmatprep.subr.mxu0 0.0
        %745 = vmatpush2.msra.mxu0 0.0
        %746 = vmatprep.subr.mxu0 0.0
        %747 = vmatpush2.msra.mxu0 0.0
        %748 = vmatprep.subr.mxu0 0.0
        %749 = vmatpush2.msra.mxu0 0.0
        %750 = vmatprep.subr.mxu0 0.0
        %751 = vmatpush2.msra.mxu0 0.0
        %752 = vmatprep.subr.mxu0 0.0
        %753 = vmatpush2.msra.mxu0 0.0
        %754 = vmatprep.subr.mxu0 0.0
        %755 = vmatpush2.msra.mxu0 0.0
        %756 = vmatprep.subr.mxu0 0.0
        %757 = vmatpush2.msra.mxu0 0.0
        %758 = vmatprep.subr.mxu0 0.0
        %759 = vmatpush2.msra.mxu0 0.0
        %760 = vmatprep.subr.mxu0 0.0
        %761 = vmatpush2.msra.mxu0 0.0
        %762 = vmatprep.subr.mxu0 0.0
        %763 = vmatpush2.msra.mxu0 0.0
        %764 = vmatprep.subr.mxu0 0.0
        %765 = vmatpush2.msra.mxu0 0.0
        %766 = vmatprep.mubr.f32.mxu0 0.0
        %767 = vmatmul.mubr.f32.gmra.mxu0 %v700
        %v768 = vpop.f32.mrf.mxu0
        %v769 = vadd.f32 0.0, %v768
        %v770 = vpop.f32.mrf.mxu0
        %771 = vdwg.mxu0
        %v772 = vadd.f32 %v612, %v769
        %v773 = vld [vmem:[%s3] sm:$0xff]
        %v774 = vld [vmem:[%s3 + $0x8] sm:$0xff]
        %vm775 = vcmask 64512
        %v777 = vsel %vm775, %v773, 0
        %v780 = vsel %vm775, %v774, 0
        %782 = vmatprep.subr.mxu0 0.0
        %783 = vmatpush1.msra.mxu0 0.0
        %784 = vmatprep.subr.mxu0 0.0
        %785 = vmatpush1.msra.mxu0 0.0
        %786 = vmatprep.subr.mxu0 0.0
        %787 = vmatpush1.msra.mxu0 0.0
        %788 = vmatprep.subr.mxu0 0.0
        %789 = vmatpush1.msra.mxu0 0.0
        %790 = vmatprep.subr.mxu0 0.0
        %791 = vmatpush1.msra.mxu0 0.0
        %792 = vmatprep.subr.mxu0 0.0
        %793 = vmatpush1.msra.mxu0 0.0
        %794 = vmatprep.subr.mxu0 0.0
        %795 = vmatpush1.msra.mxu0 0.0
        %796 = vmatprep.subr.mxu0 0.0
        %797 = vmatpush1.msra.mxu0 0.0
        %798 = vmatprep.subr.mxu0 0.0
        %799 = vmatpush1.msra.mxu0 0.0
        %800 = vmatprep.subr.mxu0 0.0
        %801 = vmatpush1.msra.mxu0 0.0
        %802 = vmatprep.subr.mxu0 0.0
        %803 = vmatpush1.msra.mxu0 0.0
        %804 = vmatprep.subr.mxu0 0.0
        %805 = vmatpush1.msra.mxu0 0.0
        %806 = vmatprep.subr.mxu0 0.0
        %807 = vmatpush1.msra.mxu0 0.0
        %808 = vmatprep.subr.mxu0 0.0
        %809 = vmatpush1.msra.mxu0 0.0
        %810 = vmatprep.subr.mxu0 0.0
        %811 = vmatpush1.msra.mxu0 0.0
        %812 = vmatprep.subr.mxu0 0.0
        %813 = vmatpush1.msra.mxu0 %v772
        %814 = vmatprep.subr.mxu0 0.0
        %815 = vmatpush2.msra.mxu0 0.0
        %816 = vmatprep.subr.mxu0 0.0
        %817 = vmatpush2.msra.mxu0 0.0
        %818 = vmatprep.subr.mxu0 0.0
        %819 = vmatpush2.msra.mxu0 0.0
        %820 = vmatprep.subr.mxu0 0.0
        %821 = vmatpush2.msra.mxu0 0.0
        %822 = vmatprep.subr.mxu0 0.0
        %823 = vmatpush2.msra.mxu0 0.0
        %824 = vmatprep.subr.mxu0 0.0
        %825 = vmatpush2.msra.mxu0 0.0
        %826 = vmatprep.subr.mxu0 0.0
        %827 = vmatpush2.msra.mxu0 0.0
        %828 = vmatprep.subr.mxu0 0.0
        %829 = vmatpush2.msra.mxu0 0.0
        %830 = vmatprep.subr.mxu0 0.0
        %831 = vmatpush2.msra.mxu0 0.0
        %832 = vmatprep.subr.mxu0 0.0
        %833 = vmatpush2.msra.mxu0 0.0
        %834 = vmatprep.subr.mxu0 0.0
        %835 = vmatpush2.msra.mxu0 0.0
        %836 = vmatprep.subr.mxu0 0.0
        %837 = vmatpush2.msra.mxu0 0.0
        %838 = vmatprep.subr.mxu0 0.0
        %839 = vmatpush2.msra.mxu0 0.0
        %840 = vmatprep.subr.mxu0 0.0
        %841 = vmatpush2.msra.mxu0 0.0
        %842 = vmatprep.subr.mxu0 0.0
        %843 = vmatpush2.msra.mxu0 0.0
        %844 = vmatprep.subr.mxu0 0.0
        %845 = vmatpush2.msra.mxu0 0.0
        %846 = vmatprep.mubr.f32.mxu0 0.0
        %847 = vmatmul.mubr.f32.gmra.mxu0 %v777
        %v848 = vpop.f32.mrf.mxu0
        %v849 = vadd.f32 0.0, %v848
        %v850 = vpop.f32.mrf.mxu0
        %851 = vmatprep.mubr.f32.mxu0 0.0
        %852 = vmatmul.mubr.f32.gmra.mxu0 %v780
        %v853 = vpop.f32.mrf.mxu0
        %v854 = vadd.f32 0.0, %v853
        %v855 = vpop.f32.mrf.mxu0
        %856 = vdwg.mxu0
        %v857 = vld [vmem:[#allocation7] sm:$0xff]
        %v858 = vld [vmem:[#allocation7 + $0x8] sm:$0xff]
        %v859 = vld [vmem:[#allocation7 + $0x10] sm:$0xff]
        %v860 = vld [vmem:[#allocation7 + $0x18] sm:$0xff]
        %v861 = vld [vmem:[#allocation7 + $0x20] sm:$0xff]
        %v862 = vld [vmem:[#allocation7 + $0x28] sm:$0xff]
        %v863 = vld [vmem:[#allocation7 + $0x30] sm:$0xff]
        %v864 = vld [vmem:[#allocation7 + $0x38] sm:$0xff]
        %v865 = vld [vmem:[%s5] sm:$0x1]
        %v867 = vlaneseq
        %v868 = vshrl.u32 %v867, 7
        %v869 = vsub.s32 0, %v868
        %v870 = vrot.slane %v865, %v869
        %v873 = vsel %vm468, %v849, 0
        %v876 = vsel %vm468, %v854, 0
        %878 = vmatprep.subr.mxu0 0.0
        %879 = vmatpush1.msra.mxu0 0.0
        %880 = vmatprep.subr.mxu0 0.0
        %881 = vmatpush1.msra.mxu0 0.0
        %882 = vmatprep.subr.mxu0 0.0
        %883 = vmatpush1.msra.mxu0 0.0
        %884 = vmatprep.subr.mxu0 0.0
        %885 = vmatpush1.msra.mxu0 0.0
        %886 = vmatprep.subr.mxu0 0.0
        %887 = vmatpush1.msra.mxu0 0.0
        %888 = vmatprep.subr.mxu0 0.0
        %889 = vmatpush1.msra.mxu0 0.0
        %890 = vmatprep.subr.mxu0 0.0
        %891 = vmatpush1.msra.mxu0 0.0
        %892 = vmatprep.subr.mxu0 0.0
        %893 = vmatpush1.msra.mxu0 0.0
        %894 = vmatprep.subr.mxu0 0.0
        %895 = vmatpush1.msra.mxu0 %v864
        %896 = vmatprep.subr.mxu0 0.0
        %897 = vmatpush1.msra.mxu0 %v863
        %898 = vmatprep.subr.mxu0 0.0
        %899 = vmatpush1.msra.mxu0 %v862
        %900 = vmatprep.subr.mxu0 0.0
        %901 = vmatpush1.msra.mxu0 %v861
        %902 = vmatprep.subr.mxu0 0.0
        %903 = vmatpush1.msra.mxu0 %v860
        %904 = vmatprep.subr.mxu0 0.0
        %905 = vmatpush1.msra.mxu0 %v859
        %906 = vmatprep.subr.mxu0 0.0
        %907 = vmatpush1.msra.mxu0 %v858
        %908 = vmatprep.subr.mxu0 0.0
        %909 = vmatpush1.msra.mxu0 %v857
        %910 = vmatprep.subr.mxu0 0.0
        %911 = vmatpush2.msra.mxu0 0.0
        %912 = vmatprep.subr.mxu0 0.0
        %913 = vmatpush2.msra.mxu0 0.0
        %914 = vmatprep.subr.mxu0 0.0
        %915 = vmatpush2.msra.mxu0 0.0
        %916 = vmatprep.subr.mxu0 0.0
        %917 = vmatpush2.msra.mxu0 0.0
        %918 = vmatprep.subr.mxu0 0.0
        %919 = vmatpush2.msra.mxu0 0.0
        %920 = vmatprep.subr.mxu0 0.0
        %921 = vmatpush2.msra.mxu0 0.0
        %922 = vmatprep.subr.mxu0 0.0
        %923 = vmatpush2.msra.mxu0 0.0
        %924 = vmatprep.subr.mxu0 0.0
        %925 = vmatpush2.msra.mxu0 0.0
        %926 = vmatprep.subr.mxu0 0.0
        %927 = vmatpush2.msra.mxu0 0.0
        %928 = vmatprep.subr.mxu0 0.0
        %929 = vmatpush2.msra.mxu0 0.0
        %930 = vmatprep.subr.mxu0 0.0
        %931 = vmatpush2.msra.mxu0 0.0
        %932 = vmatprep.subr.mxu0 0.0
        %933 = vmatpush2.msra.mxu0 0.0
        %934 = vmatprep.subr.mxu0 0.0
        %935 = vmatpush2.msra.mxu0 0.0
        %936 = vmatprep.subr.mxu0 0.0
        %937 = vmatpush2.msra.mxu0 0.0
        %938 = vmatprep.subr.mxu0 0.0
        %939 = vmatpush2.msra.mxu0 0.0
        %940 = vmatprep.subr.mxu0 0.0
        %941 = vmatpush2.msra.mxu0 0.0
        %942 = vmatprep.mubr.f32.mxu0 0.0
        %943 = vmatmul.mubr.f32.gmra.mxu0 %v873
        %v944 = vpop.f32.mrf.mxu0
        %v945 = vadd.f32 %v870, %v944
        %v946 = vpop.f32.mrf.mxu0
        %947 = vmatprep.mubr.f32.mxu0 0.0
        %948 = vmatmul.mubr.f32.gmra.mxu0 %v876
        %v949 = vpop.f32.mrf.mxu0
        %v950 = vadd.f32 %v870, %v949
        %v951 = vpop.f32.mrf.mxu0
        %952 = vdwg.mxu0
        %v953 = vmax.f32 %v945, 0.0
        %v954 = vmax.f32 %v950, 0.0
        %955 = vst [vmem:[%s298] sm:$0xff] %v953
        %956 = vst [vmem:[%s298 + $0x8] sm:$0xff] %v954
        %s957 = sand.u32 %s163, 1
        %s958 = scalar_lea.sflag [#allocation4], %s957
        %s959 = sand.u32 %s163, 1
        %s960 = smul.addr %s959, 16
        %s961 = scalar_lea.vmem [#allocation8], %s960
        // Predicated region
        $region57: #{tpu_custom_call.1} parent=43 // pred_check
          %p962 = pneg %p173
        $region58: #{tpu_custom_call.1} parent=43 // pred_check_branch
          %964 = sbr.rel (%p962) target = $region60
        $region59: #{tpu_custom_call.1} parent=43 // pred_region
          %s966 = ssub.s32 256, 256
          %967 = vsyncadd %s958, %s966
          %s968 = smul.addr %s24, 2
          %s969 = smul.addr %s968, 128
          %s970 = scalar_lea.hbm %s6, %s969
          %s971 = sshll.u32 %s961, 4
          %s972 = int_to_ptr.vmem [resolvable:$true] %s971
          %977 = dma.vmem_to_hbm [thread:$0]  %s972, 256, %s970, %s958, 128, 128, 8
        $region60: #{tpu_custom_call.1} parent=43 // pred_fallthru
          _
      $region44: #{tpu_custom_call.1} parent=5 // pred_fallthru
        _
      %p978 = scmp.le.s32.totalorder 2, %s19
      // Predicated region
      $region61: #{tpu_custom_call.1} parent=5 // pred_check
        %p979 = pneg %p978
      $region62: #{tpu_custom_call.1} parent=5 // pred_check_branch
        %981 = sbr.rel (%p979) target = $region64
      $region63: #{tpu_custom_call.1} parent=5 // pred_region
        %s982 = ssub.s32 %s19, 2
        // Predicated region
        $region65: #{tpu_custom_call.1} parent=63 // pred_check
          %p983 = pneg %p179
        $region66: #{tpu_custom_call.1} parent=63 // pred_check_branch
          %985 = sbr.rel (%p983) target = $region68
        $region67: #{tpu_custom_call.1} parent=63 // pred_region
          %s986 = sand.u32 %s164, 1
          %s987 = scalar_lea.sflag [#allocation4], %s986
          %s988 = sand.u32 %s164, 1
          %s989 = smul.addr %s988, 16
          %s990 = scalar_lea.vmem [#allocation8], %s989
          %991 = dma.done %s987, 256
        $region68: #{tpu_custom_call.1} parent=63 // pred_fallthru
          _
      $region64: #{tpu_custom_call.1} parent=5 // pred_fallthru
        _
    $region6: #{tpu_custom_call.1} parent=1 // loop_footer
      %s23 = sadd.s32 1, %s19
    $region7: #{tpu_custom_call.1} parent=1 // loop_footer_branch
      %18 = sbr.rel target = $region3
    $region8: #{tpu_custom_call.1} parent=1 // loop_exit
      _
    %992 = vsyncpa [#allocation3], 1
    %s993 = scalar_lea.sflag [#allocation3], 1
    %994 = vsyncpa %s993, 1
    %995 = vsyncpa [#allocation6], 1
    %996 = vsyncpa [#allocation4], 1
    %s997 = scalar_lea.sflag [#allocation4], 1
    %998 = vsyncpa %s997, 1

</llo_original>
